<compile_context>
chip_gen: v6e
topology: v6e:2x2x1
jax: 0.10.0
libtpu: 0.0.40
codegen_flags: <defaults>
</compile_context>

<pallas_src>
import functools
import math

import jax
import jax.numpy as jnp
import numpy as np
from jax.experimental import pallas as pl
from jax.experimental.pallas import tpu as pltpu


def _glow_base_kernel(p_ref, eps_ref, z_ref, logp_ref, *,
                      logp_const, logscale_factor):
    # Stacked, lane-expanded per-channel params: rows are
    # [loc, loc_logs, log_scale, log_scale_logs], shape (4, C*HW), f32.
    p = p_ref[...]
    loc = p[0:1, :] * jnp.exp(p[1:2, :] * logscale_factor)          # (1, CHW)
    log_scale = p[2:3, :] * jnp.exp(p[3:4, :] * logscale_factor)    # (1, CHW)
    scale = jnp.exp(log_scale)                                      # (1, CHW)

    eps = eps_ref[...]                       # (tb, CHW), native dtype
    eps_f32 = eps.astype(jnp.float32)

    # z = loc + exp(log_scale) * eps  (sublane broadcast of the (1, CHW) rows)
    z = loc + scale * eps_f32
    z_ref[...] = z.astype(z_ref.dtype)

    # log_scale was expanded num_pix times per channel, so
    #   sum(log_scale_lane) == num_pix * sum_c(log_scale_c)
    sum_ls = jnp.sum(log_scale)                                     # scalar
    sq = jnp.sum(eps_f32 * eps_f32, axis=1, keepdims=True)          # (tb, 1)
    logp_ref[...] = logp_const - sum_ls - 0.5 * sq


def _choose_block_samples(num_samples, bytes_per_sample, budget_bytes=4 << 20):
    """Largest divisor of num_samples that keeps sublanes dense (multiple of 8)
    and the double-buffered per-block working set under budget; falls back to
    the full batch for small / odd batch sizes."""
    cands = [t for t in range(8, num_samples + 1, 8) if num_samples % t == 0]
    fitting = [t for t in cands if t * bytes_per_sample <= budget_bytes]
    if fitting:
        return max(fitting)
    if cands:
        return min(cands)
    return num_samples


def glow_base_forward(params, eps, *, logscale_factor=3.0, block_samples=None,
                      interpret=False):
    """params: dict of (1, C, 1, ..., 1) arrays: loc, loc_logs, log_scale,
    log_scale_logs.  eps: (B, C, ...) standard-normal noise (plays the role of
    torch.randn in forward).  Returns (z, log_p): z has eps's shape/dtype,
    log_p has shape (B,) float32."""
    B = eps.shape[0]
    shape = eps.shape[1:]
    C = shape[0]
    d = int(np.prod(shape))
    num_pix = int(np.prod(shape[1:]))     # prod of empty tuple -> 1
    chw = d

    # --- layout-only prep in the wrapper (no math hoisted out of the kernel) ---
    # Stack the 4 per-channel params into one slab and expand each channel
    # value across its num_pix lanes, so the kernel sees a single lane-dense
    # (4, C*num_pix) input instead of 5 tiny DMAs per step.
    p = jnp.stack(
        [params["loc"].reshape(C),
         params["loc_logs"].reshape(C),
         params["log_scale"].reshape(C),
         params["log_scale_logs"].reshape(C)],
        axis=0).astype(jnp.float32)                       # (4, C)
    p_lane = jnp.repeat(p, num_pix, axis=1)               # (4, C*num_pix)

    eps2d = eps.reshape(B, chw)                           # free reshape, native dtype

    # --- tile choice ---
    # Per-sample bytes in the double-buffered working set (eps in + z out).
    bytes_per_sample = 2 * chw * (eps.dtype.itemsize + eps.dtype.itemsize)
    if block_samples is None:
        block_samples = _choose_block_samples(B, bytes_per_sample)
    tb = int(block_samples)
    assert B % tb == 0, "block_samples must divide the batch size"
    assert tb % 8 == 0 or tb == B, "block_samples must be a multiple of 8 (or the full batch)"
    grid = (B // tb,)

    block_bytes = tb * chw * 2 * eps.dtype.itemsize + 4 * chw * 4
    vmem_limit = int(min(32 << 20, max(8 << 20, 4 * block_bytes)))

    kernel = functools.partial(
        _glow_base_kernel,
        logp_const=-0.5 * d * math.log(2.0 * math.pi),
        logscale_factor=float(logscale_factor),
    )

    z2d, logp = pl.pallas_call(
        kernel,
        grid_spec=pltpu.PrefetchScalarGridSpec(
            num_scalar_prefetch=0,
            grid=grid,
            in_specs=[
                pl.BlockSpec((4, chw), lambda i: (0, 0)),    # stacked params (stay resident)
                pl.BlockSpec((tb, chw), lambda i: (i, 0)),   # eps sample-block
            ],
            out_specs=[
                pl.BlockSpec((tb, chw), lambda i: (i, 0)),   # z sample-block
                pl.BlockSpec((tb, 1), lambda i: (i, 0)),     # per-sample log_p
            ],
        ),
        out_shape=(
            jax.ShapeDtypeStruct((B, chw), eps.dtype),
            jax.ShapeDtypeStruct((B, 1), jnp.float32),
        ),
        compiler_params=pltpu.CompilerParams(
            dimension_semantics=("parallel",),
            vmem_limit_bytes=vmem_limit,
        ),
        interpret=interpret,
    )(p_lane, eps2d)

    return z2d.reshape(eps.shape), logp[:, 0]


def glow_base_forward_ref(params, eps, *, logscale_factor=3.0):
    """Pure-JAX reference mirroring the PyTorch forward exactly."""
    shape = eps.shape[1:]
    d = int(np.prod(shape))
    num_pix = int(np.prod(shape[1:]))
    loc = params["loc"] * jnp.exp(params["loc_logs"] * logscale_factor)
    log_scale = params["log_scale"] * jnp.exp(params["log_scale_logs"] * logscale_factor)
    z = loc + jnp.exp(log_scale) * eps
    sum_dims = tuple(range(1, len(shape) + 1))
    log_p = (-0.5 * d * np.log(2 * np.pi)
             - num_pix * jnp.sum(log_scale, axis=sum_dims)
             - 0.5 * jnp.sum(eps.astype(jnp.float32) ** 2, axis=sum_dims))
    return z, log_p


if __name__ == "__main__":
    # Module config: shape = (C, H, W), num_classes=None (unconditional base).
    C, H, W = 4, 16, 16
    num_samples = 16   # batch size B (forward(num_samples)); 2 blocks of 8 samples

    key = jax.random.PRNGKey(0)
    k_eps, k_loc, k_llogs, k_ls, k_lslogs = jax.random.split(key, 5)

    # nn.Parameter shapes are (1, C, 1, 1); the PyTorch init is zeros — use
    # small random values so the kernel math is actually exercised.
    params = {
        "loc": 0.1 * jax.random.normal(k_loc, (1, C, 1, 1), jnp.float32),
        "loc_logs": 0.05 * jax.random.normal(k_llogs, (1, C, 1, 1), jnp.float32),
        "log_scale": 0.1 * jax.random.normal(k_ls, (1, C, 1, 1), jnp.float32),
        "log_scale_logs": 0.05 * jax.random.normal(k_lslogs, (1, C, 1, 1), jnp.float32),
    }

    # eps plays the role of torch.randn((num_samples,) + shape)
    eps = jax.random.normal(k_eps, (num_samples, C, H, W), jnp.float32)

    # block_samples=8 -> grid of 2 sample-blocks (exercises the pipeline).
    z, log_p = glow_base_forward(params, eps, logscale_factor=3.0, block_samples=8)
    z = jax.block_until_ready(z)
    log_p = jax.block_until_ready(log_p)

    z_ref, log_p_ref = glow_base_forward_ref(params, eps, logscale_factor=3.0)
    np.testing.assert_allclose(np.asarray(z), np.asarray(z_ref), rtol=1e-5, atol=1e-5)
    np.testing.assert_allclose(np.asarray(log_p), np.asarray(log_p_ref), rtol=2e-5, atol=1e-3)

    print("KERNEL_OK")
</pallas_src>

<mosaic_0001>
module attributes {stable_mosaic.version = 11 : i64} {
  func.func @_glow_base_kernel(%arg0: i32, %arg1: memref<4x1024xf32, #tpu.memory_space<vmem>>, %arg2: memref<8x1024xf32, #tpu.memory_space<vmem>>, %arg3: memref<8x1024xf32, #tpu.memory_space<vmem>>, %arg4: memref<8x1xf32, #tpu.memory_space<vmem>>) attributes {dimension_semantics = [#tpu.dimension_semantics<parallel>], iteration_bounds = array<i64: 2>, scalar_prefetch = 0 : i64, scratch_operands = 0 : i64, tpu.core_type = #tpu.core_type<tc>, window_params = [{pipeline_mode = #tpu.pipeline_mode<synchronous>, transform_indices = @transform_0, window_bounds = array<i64: 4, 1024>}, {transform_indices = @transform_1, window_bounds = array<i64: 8, 1024>}, {transform_indices = @transform_2, window_bounds = array<i64: 8, 1024>}, {transform_indices = @transform_3, window_bounds = array<i64: 8, 1>}]} {
    %c0 = arith.constant 0 : index
    %c0_0 = arith.constant 0 : index
    %0 = vector.load %arg1[%c0, %c0_0] : memref<4x1024xf32, #tpu.memory_space<vmem>>, vector<4x1024xf32>
    %1 = vector.extract_strided_slice %0 {offsets = [0, 0], sizes = [1, 1024], strides = [1, 1]} : vector<4x1024xf32> to vector<1x1024xf32>
    %2 = vector.extract_strided_slice %0 {offsets = [1, 0], sizes = [1, 1024], strides = [1, 1]} : vector<4x1024xf32> to vector<1x1024xf32>
    %cst = arith.constant 3.000000e+00 : f32
    %3 = vector.broadcast %cst : f32 to vector<1x1024xf32>
    %4 = arith.mulf %2, %3 : vector<1x1024xf32>
    %5 = math.exp %4 : vector<1x1024xf32>
    %6 = arith.mulf %1, %5 : vector<1x1024xf32>
    %7 = vector.extract_strided_slice %0 {offsets = [2, 0], sizes = [1, 1024], strides = [1, 1]} : vector<4x1024xf32> to vector<1x1024xf32>
    %8 = vector.extract_strided_slice %0 {offsets = [3, 0], sizes = [1, 1024], strides = [1, 1]} : vector<4x1024xf32> to vector<1x1024xf32>
    %cst_1 = arith.constant 3.000000e+00 : f32
    %9 = vector.broadcast %cst_1 : f32 to vector<1x1024xf32>
    %10 = arith.mulf %8, %9 : vector<1x1024xf32>
    %11 = math.exp %10 : vector<1x1024xf32>
    %12 = arith.mulf %7, %11 : vector<1x1024xf32>
    %13 = math.exp %12 : vector<1x1024xf32>
    %c0_2 = arith.constant 0 : index
    %c0_3 = arith.constant 0 : index
    %14 = vector.load %arg2[%c0_2, %c0_3] : memref<8x1024xf32, #tpu.memory_space<vmem>>, vector<8x1024xf32>
    %15 = vector.broadcast %13 : vector<1x1024xf32> to vector<8x1024xf32>
    %16 = arith.mulf %15, %14 : vector<8x1024xf32>
    %17 = vector.broadcast %6 : vector<1x1024xf32> to vector<8x1024xf32>
    %18 = arith.addf %17, %16 : vector<8x1024xf32>
    %c0_4 = arith.constant 0 : index
    %c0_5 = arith.constant 0 : index
    %19 = vector.load %arg3[%c0_4, %c0_5] : memref<8x1024xf32, #tpu.memory_space<vmem>>, vector<8x1024xf32>
    tpu.vector_store %arg3[%c0_4, %c0_5], %18 {strides = array<i32>} : memref<8x1024xf32, #tpu.memory_space<vmem>>, vector<8x1024xf32>,
    %20 = vector.shape_cast %12 : vector<1x1024xf32> to vector<1x1x1024xf32>
    %cst_6 = arith.constant dense<0.000000e+00> : vector<1xf32>
    %21 = vector.multi_reduction <add>, %20, %cst_6 [1, 2] : vector<1x1x1024xf32> to vector<1xf32>
    %22 = vector.shape_cast %21 : vector<1xf32> to vector<1x1x1xf32>
    %23 = vector.extract %22[0, 0, 0] : f32 from vector<1x1x1xf32>
    %24 = arith.mulf %14, %14 : vector<8x1024xf32>
    %cst_7 = arith.constant dense<0.000000e+00> : vector<8xf32>
    %25 = vector.multi_reduction <add>, %24, %cst_7 [1] : vector<8x1024xf32> to vector<8xf32>
    %26 = vector.shape_cast %25 : vector<8xf32> to vector<8x1xf32>
    %cst_8 = arith.constant -940.993041 : f32
    %27 = arith.subf %cst_8, %23 : f32
    %cst_9 = arith.constant 5.000000e-01 : f32
    %28 = vector.broadcast %cst_9 : f32 to vector<8x1xf32>
    %29 = arith.mulf %28, %26 : vector<8x1xf32>
    %30 = vector.broadcast %27 : f32 to vector<8x1xf32>
    %31 = arith.subf %30, %29 : vector<8x1xf32>
    %c0_10 = arith.constant 0 : index
    %c0_11 = arith.constant 0 : index
    %32 = vector.load %arg4[%c0_10, %c0_11] : memref<8x1xf32, #tpu.memory_space<vmem>>, vector<8x1xf32>
    tpu.vector_store %arg4[%c0_10, %c0_11], %31 {strides = array<i32>} : memref<8x1xf32, #tpu.memory_space<vmem>>, vector<8x1xf32>,
    return
  }
  func.func @transform_0(%arg0: i32) -> (i32, i32) {
    %c0_i32 = arith.constant 0 : i32
    %c0_i32_0 = arith.constant 0 : i32
    %c0_i32_1 = arith.constant 0 : i32
    return %c0_i32, %c0_i32_0 : i32, i32
  }
  func.func @transform_1(%arg0: i32) -> (i32, i32) {
    %c0_i32 = arith.constant 0 : i32
    %c0_i32_0 = arith.constant 0 : i32
    return %arg0, %c0_i32 : i32, i32
  }
  func.func @transform_2(%arg0: i32) -> (i32, i32) {
    %c0_i32 = arith.constant 0 : i32
    %c0_i32_0 = arith.constant 0 : i32
    return %arg0, %c0_i32 : i32, i32
  }
  func.func @transform_3(%arg0: i32) -> (i32, i32) {
    %c0_i32 = arith.constant 0 : i32
    %c0_i32_0 = arith.constant 0 : i32
    return %arg0, %c0_i32 : i32, i32
  }
}

</mosaic_0001>

<llo_original>
// kernel: tpu_custom_call.1
$region0: #{tpu_custom_call.1}
  #allocation0 [shape = 'u32[]', space=smem, size = 0x4, offset = 0x4, fixed_abs, tag = 'smem constant byte address 0x4 - core index']
  #allocation1 [shape = 'u32[144,128]{1,0:T(1,128)}', space=vmem, size = 0x12000, scoped, tag = 'internal scratch']
  %s0 = inlined_call_operand.hbm [shape: f32[4,1024], index: 0, kind: input, shape index: {}]
  %s1 = inlined_call_operand.hbm [shape: f32[16,1024], index: 1, kind: input, shape index: {}]
  %s2 = inlined_call_operand.hbm [shape: f32[16,1024], index: 2, kind: output, shape index: {0}]
  %s3 = inlined_call_operand.vmem [shape: f32[16,1], index: 3, kind: output, shape index: {1}]
  %4 = xla_tuple %s2, %s3
  %s5 = sld [smem:[#allocation0]]
  $region57: #{tpu_custom_call.1} parent=0
    _
  %s7 = ssub.s32 1, %s5
  %s8 = scalar_select 0, %s7, %s5
  $region1: #{tpu_custom_call.1} parent=0
    #allocation2 [shape = 'u8[16384]{0}', space=vmem, size = 0x4000, scoped, tag = 'input window, operand 0, single buffered']
    #allocation3 [shape = 's32[2]{0}', space=sflag, size = 0x8, scoped, tag = 'scoped memory for tpu_custom_call.1']
    #allocation4 [shape = 's32[2]{0}', space=sflag, size = 0x8, scoped, tag = 'scoped memory for tpu_custom_call.1']
    #allocation5 [shape = 'u8[65536]{0}', space=vmem, size = 0x10000, scoped, tag = 'input window, operand 1']
    #allocation6 [shape = 's32[2]{0}', space=sflag, size = 0x8, scoped, tag = 'scoped memory for tpu_custom_call.1']
    #allocation7 [shape = 'u8[65536]{0}', space=vmem, size = 0x10000, scoped, tag = 'output window, operand 0']
    %9 = vsyncpa [#allocation3], 0
    %10 = vsyncpa [#allocation6], 0
    %s11 = scalar_lea.sflag [#allocation6], 1
    %12 = vsyncpa %s11, 0
    %13 = vsyncpa [#allocation4], 0
    %s14 = scalar_lea.sflag [#allocation4], 1
    %15 = vsyncpa %s14, 0
    loop: start=0, step=1, limit=4
    $region2: #{tpu_custom_call.1} parent=1 // loop_pre_header
      _
    $region3: #{tpu_custom_call.1} parent=1 // loop_header
      %s17 = sphi 0, %s21
      %p18 = scmp.ge.s32.totalorder %s17, 4
      %s25 = sphi 0, %s25
      %s27 = sphi 0, %s25
      %s28 = sphi 0, %s27
      %s42 = sphi 0, %s28
      %s48 = sphi 0, %s50
      %s51 = sphi 0, %s48
      %s52 = sphi 0, %s51
      %s68 = sphi 0, %s52
      %s74 = sphi 0, %s76
      %s77 = sphi 0, %s74
      %s78 = sphi 0, %s77
      %s94 = sphi 0, %s78
      %s100 = sphi 0, %s102
      %s103 = sphi 0, %s100
      %s104 = sphi 0, %s103
      %s120 = sphi 0, %s104
    $region4: #{tpu_custom_call.1} parent=1 // loop_header_branch
      %20 = sbr.rel (%p18) target = $region8
    $region5: #{tpu_custom_call.1} parent=1 // loop_body
      %s22 = ssub.s32 %s17, 1
      %s23 = ssub.s32 %s17, 2
      %s24 = sadd.s32 %s17, 1
      %s26 = sadd.s32 %s25, 1
      %p29 = scmp.eq.s32.totalorder %s17, 1
      %p30 = scmp.ne.s32.totalorder %s25, %s27
      %p31 = scmp.eq.s32.totalorder %s17, 0
      %p32 = por %p30, %p31
      %p33 = scmp.ne.s32.totalorder %s25, %s27
      %p34 = scmp.eq.s32.totalorder %s22, 1
      %p35 = por %p33, %p34
      %p36 = scmp.ne.s32.totalorder %s27, %s28
      %p37 = scmp.eq.s32.totalorder %s22, 0
      %p38 = por %p36, %p37
      %p39 = scmp.ne.s32.totalorder %s27, %s28
      %p40 = scmp.eq.s32.totalorder %s23, 1
      %p41 = por %p39, %p40
      %p43 = scmp.ne.s32.totalorder %s28, %s42
      %p44 = scmp.eq.s32.totalorder %s23, 0
      %p45 = por %p43, %p44
      %s46 = ssub.s32 %s17, %s24
      %p47 = scmp.eq.s32.totalorder %s46, 0
      %s49 = sadd.s32 %s48, 1
      %s50 = scalar_select %p47, %s48, %s49
      %p53 = pneg %p47
      %p54 = scmp.eq.s32.totalorder %s17, 1
      %p55 = por %p53, %p54
      %p56 = scmp.ne.s32.totalorder %s48, %s51
      %p57 = scmp.eq.s32.totalorder %s17, 0
      %p58 = por %p56, %p57
      %p59 = scmp.ne.s32.totalorder %s48, %s51
      %p60 = scmp.eq.s32.totalorder %s22, 1
      %p61 = por %p59, %p60
      %p62 = scmp.ne.s32.totalorder %s51, %s52
      %p63 = scmp.eq.s32.totalorder %s22, 0
      %p64 = por %p62, %p63
      %p65 = scmp.ne.s32.totalorder %s51, %s52
      %p66 = scmp.eq.s32.totalorder %s23, 1
      %p67 = por %p65, %p66
      %p69 = scmp.ne.s32.totalorder %s52, %s68
      %p70 = scmp.eq.s32.totalorder %s23, 0
      %p71 = por %p69, %p70
      %s72 = ssub.s32 %s17, %s24
      %p73 = scmp.eq.s32.totalorder %s72, 0
      %s75 = sadd.s32 %s74, 1
      %s76 = scalar_select %p73, %s74, %s75
      %p79 = pneg %p73
      %p80 = scmp.eq.s32.totalorder %s17, 1
      %p81 = por %p79, %p80
      %p82 = scmp.ne.s32.totalorder %s74, %s77
      %p83 = scmp.eq.s32.totalorder %s17, 0
      %p84 = por %p82, %p83
      %p85 = scmp.ne.s32.totalorder %s74, %s77
      %p86 = scmp.eq.s32.totalorder %s22, 1
      %p87 = por %p85, %p86
      %p88 = scmp.ne.s32.totalorder %s77, %s78
      %p89 = scmp.eq.s32.totalorder %s22, 0
      %p90 = por %p88, %p89
      %p91 = scmp.ne.s32.totalorder %s77, %s78
      %p92 = scmp.eq.s32.totalorder %s23, 1
      %p93 = por %p91, %p92
      %p95 = scmp.ne.s32.totalorder %s78, %s94
      %p96 = scmp.eq.s32.totalorder %s23, 0
      %p97 = por %p95, %p96
      %s98 = ssub.s32 %s17, %s24
      %p99 = scmp.eq.s32.totalorder %s98, 0
      %s101 = sadd.s32 %s100, 1
      %s102 = scalar_select %p99, %s100, %s101
      %p105 = pneg %p99
      %p106 = scmp.eq.s32.totalorder %s17, 1
      %p107 = por %p105, %p106
      %p108 = scmp.ne.s32.totalorder %s100, %s103
      %p109 = scmp.eq.s32.totalorder %s17, 0
      %p110 = por %p108, %p109
      %p111 = scmp.ne.s32.totalorder %s100, %s103
      %p112 = scmp.eq.s32.totalorder %s22, 1
      %p113 = por %p111, %p112
      %p114 = scmp.ne.s32.totalorder %s103, %s104
      %p115 = scmp.eq.s32.totalorder %s22, 0
      %p116 = por %p114, %p115
      %p117 = scmp.ne.s32.totalorder %s103, %s104
      %p118 = scmp.eq.s32.totalorder %s23, 1
      %p119 = por %p117, %p118
      %p121 = scmp.ne.s32.totalorder %s104, %s120
      %p122 = scmp.eq.s32.totalorder %s23, 0
      %p123 = por %p121, %p122
      %p124 = scmp.le.s32.totalorder 1, %s17
      %p125 = scmp.lt.s32.totalorder %s17, 3
      %p126 = pnand %p124, %p125
      %p127 = pneg %p126
      // Predicated region
      $region9: #{tpu_custom_call.1} parent=5 // pred_check
        _
      $region10: #{tpu_custom_call.1} parent=5 // pred_check_branch
        %129 = sbr.rel (%p126) target = $region12
      $region11: #{tpu_custom_call.1} parent=5 // pred_region
        %s130 = ssub.s32 %s17, 1
        // Predicated region
        $region13: #{tpu_custom_call.1} parent=11 // pred_check
          %p131 = pneg %p38
        $region14: #{tpu_custom_call.1} parent=11 // pred_check_branch
          %133 = sbr.rel (%p131) target = $region16
        $region15: #{tpu_custom_call.1} parent=11 // pred_region
          %s135 = ssub.s32 512, 512
          %136 = vsyncadd [#allocation3], %s135
          %s138 = sshll.u32 [#allocation2], 4
          %s139 = int_to_ptr.vmem [resolvable:$true] %s138
          %141 = dma.hbm_to_vmem [thread:$0]  %s0, 512, %s139, [#allocation3]
        $region16: #{tpu_custom_call.1} parent=11 // pred_fallthru
          _
      $region12: #{tpu_custom_call.1} parent=5 // pred_fallthru
        _
      %p142 = scmp.lt.s32.totalorder %s17, 2
      // Predicated region
      $region17: #{tpu_custom_call.1} parent=5 // pred_check
        %p143 = pneg %p142
      $region18: #{tpu_custom_call.1} parent=5 // pred_check_branch
        %145 = sbr.rel (%p143) target = $region20
      $region19: #{tpu_custom_call.1} parent=5 // pred_region
        // Predicated region
        $region21: #{tpu_custom_call.1} parent=19 // pred_check
          %p146 = pneg %p58
        $region22: #{tpu_custom_call.1} parent=19 // pred_check_branch
          %148 = sbr.rel (%p146) target = $region24
        $region23: #{tpu_custom_call.1} parent=19 // pred_region
          %s149 = sand.u32 %s48, 1
          %s150 = scalar_lea.sflag [#allocation6], %s149
          %s151 = sand.u32 %s48, 1
          %s152 = smul.addr %s151, 64
          %s153 = scalar_lea.vmem [#allocation5], %s152
          %s155 = ssub.s32 1024, 1024
          %156 = vsyncadd %s150, %s155
          %s157 = smul.addr %s17, 8
          %s158 = smul.addr %s157, 128
          %s159 = scalar_lea.hbm %s1, %s158
          %s161 = sshll.u32 %s153, 4
          %s162 = int_to_ptr.vmem [resolvable:$true] %s161
          %164 = dma.hbm_to_vmem [thread:$0]  %s159, 1024, %s162, %s150
        $region24: #{tpu_custom_call.1} parent=19 // pred_fallthru
          _
      $region20: #{tpu_custom_call.1} parent=5 // pred_fallthru
        _
      %p165 = scmp.le.s32.totalorder 1, %s17
      %p166 = scmp.lt.s32.totalorder %s17, 3
      %p167 = pnand %p165, %p166
      %p168 = pneg %p167
      // Predicated region
      $region25: #{tpu_custom_call.1} parent=5 // pred_check
        _
      $region26: #{tpu_custom_call.1} parent=5 // pred_check_branch
        %170 = sbr.rel (%p167) target = $region28
      $region27: #{tpu_custom_call.1} parent=5 // pred_region
        %s171 = ssub.s32 %s17, 1
        // Predicated region
        $region29: #{tpu_custom_call.1} parent=27 // pred_check
          %p172 = pneg %p38
        $region30: #{tpu_custom_call.1} parent=27 // pred_check_branch
          %174 = sbr.rel (%p172) target = $region32
        $region31: #{tpu_custom_call.1} parent=27 // pred_region
          %175 = dma.done [#allocation3], 512
        $region32: #{tpu_custom_call.1} parent=27 // pred_fallthru
          _
        %s176 = sand.u32 %s51, 1
        %s177 = scalar_lea.sflag [#allocation6], %s176
        %s178 = sand.u32 %s51, 1
        %s179 = smul.addr %s178, 64
        %s180 = scalar_lea.vmem [#allocation5], %s179
        // Predicated region
        $region33: #{tpu_custom_call.1} parent=27 // pred_check
          %p181 = pneg %p64
        $region34: #{tpu_custom_call.1} parent=27 // pred_check_branch
          %183 = sbr.rel (%p181) target = $region36
        $region35: #{tpu_custom_call.1} parent=27 // pred_region
          %184 = dma.done %s177, 1024
        $region36: #{tpu_custom_call.1} parent=27 // pred_fallthru
          _
        %p185 = pneg %p38
        %p186 = pneg %p35
        %s187 = sand.u32 %s51, 1
        %s188 = scalar_lea.sflag [#allocation6], %s187
        %s189 = sand.u32 %s51, 1
        %s190 = smul.addr %s189, 64
        %s191 = scalar_lea.vmem [#allocation5], %s190
        %p192 = pneg %p64
        %p193 = pneg %p61
        %p194 = pneg %p90
        %p195 = pneg %p87
        %s196 = sand.u32 %s77, 1
        %s197 = scalar_lea.sflag [#allocation4], %s196
        %s198 = sand.u32 %s77, 1
        %s199 = smul.addr %s198, 64
        %s200 = scalar_lea.vmem [#allocation7], %s199
        %p201 = pneg %p116
        %p202 = pneg %p113
        %p203 = scmp.lt.s32.totalorder %s22, 1
        %s204 = scalar_select %p203, %s22, 1
        %s205 = smul.addr %s204, 8
        %s206 = scalar_lea.vmem %s3, %s205
        %p207 = scmp.lt.s32.totalorder %s22, 1
        %s208 = scalar_select %p207, %s22, 1
        %s209 = smul.addr %s208, 8
        %s210 = scalar_lea.vmem %s3, %s209
        %v211 = vld [vmem:[#allocation2] sm:$0xff]
        %v212 = vld [vmem:[#allocation2 + $0x8] sm:$0xff]
        %v213 = vld [vmem:[#allocation2 + $0x10] sm:$0xff]
        %v214 = vld [vmem:[#allocation2 + $0x18] sm:$0xff]
        %v215 = vmul.f32 %v211, 3.0
        %v216 = vmul.f32 %v212, 3.0
        %v217 = vmul.f32 %v213, 3.0
        %v218 = vmul.f32 %v214, 3.0
        %v219 = vmul.f32 %v215, 1.442695
        %v220 = vpow.pop %v219
        %v221 = vmul.f32 %v216, 1.442695
        %v222 = vpow.pop %v221
        %v223 = vmul.f32 %v217, 1.442695
        %v224 = vpow.pop %v223
        %v225 = vmul.f32 %v218, 1.442695
        %v226 = vpow.pop %v225
        %v231 = vrot.slane %v220, 5
        %v232 = vrot.slane %v231, 4
        %v233 = vrot.slane %v222, 5
        %v234 = vrot.slane %v233, 4
        %v235 = vrot.slane %v224, 5
        %v236 = vrot.slane %v235, 4
        %v237 = vrot.slane %v226, 5
        %v238 = vrot.slane %v237, 4
        %v243 = vmul.f32 %v211, %v232
        %v244 = vmul.f32 %v212, %v234
        %v245 = vmul.f32 %v213, %v236
        %v246 = vmul.f32 %v214, %v238
        %v247 = vmul.f32 %v243, 1.442695
        %v248 = vpow.pop %v247
        %v249 = vmul.f32 %v244, 1.442695
        %v250 = vpow.pop %v249
        %v251 = vmul.f32 %v245, 1.442695
        %v252 = vpow.pop %v251
        %v253 = vmul.f32 %v246, 1.442695
        %v254 = vpow.pop %v253
        %v255 = vld [vmem:[%s180] sm:$0xff]
        %v256 = vld [vmem:[%s180 + $0x8] sm:$0xff]
        %v257 = vld [vmem:[%s180 + $0x10] sm:$0xff]
        %v258 = vld [vmem:[%s180 + $0x18] sm:$0xff]
        %v259 = vld [vmem:[%s180 + $0x20] sm:$0xff]
        %v260 = vld [vmem:[%s180 + $0x28] sm:$0xff]
        %v261 = vld [vmem:[%s180 + $0x30] sm:$0xff]
        %v262 = vld [vmem:[%s180 + $0x38] sm:$0xff]
        %v267 = vlaneseq
        %v268 = vshrl.u32 %v267, 7
        %v269 = vsub.s32 2, %v268
        %v270 = vrot.slane %v248, %v269
        %v271 = vlaneseq
        %v272 = vshrl.u32 %v271, 7
        %v273 = vsub.s32 6, %v272
        %v274 = vrot.slane %v248, %v273
        %v275 = vlaneseq
        %v276 = vshrl.u32 %v275, 7
        %v277 = vsub.s32 2, %v276
        %v278 = vrot.slane %v250, %v277
        %v279 = vlaneseq
        %v280 = vshrl.u32 %v279, 7
        %v281 = vsub.s32 6, %v280
        %v282 = vrot.slane %v250, %v281
        %v283 = vlaneseq
        %v284 = vshrl.u32 %v283, 7
        %v285 = vsub.s32 2, %v284
        %v286 = vrot.slane %v252, %v285
        %v287 = vlaneseq
        %v288 = vshrl.u32 %v287, 7
        %v289 = vsub.s32 6, %v288
        %v290 = vrot.slane %v252, %v289
        %v291 = vlaneseq
        %v292 = vshrl.u32 %v291, 7
        %v293 = vsub.s32 2, %v292
        %v294 = vrot.slane %v254, %v293
        %v295 = vlaneseq
        %v296 = vshrl.u32 %v295, 7
        %v297 = vsub.s32 6, %v296
        %v298 = vrot.slane %v254, %v297
        %v307 = vlaneseq
        %v308 = vshrl.u32 %v307, 7
        %v309 = vsub.s32 2, %v308
        %v310 = vrot.slane %v270, %v309
        %v311 = vlaneseq
        %v312 = vshrl.u32 %v311, 7
        %v313 = vsub.s32 2, %v312
        %v314 = vrot.slane %v274, %v313
        %v315 = vlaneseq
        %v316 = vshrl.u32 %v315, 7
        %v317 = vsub.s32 2, %v316
        %v318 = vrot.slane %v278, %v317
        %v319 = vlaneseq
        %v320 = vshrl.u32 %v319, 7
        %v321 = vsub.s32 2, %v320
        %v322 = vrot.slane %v282, %v321
        %v323 = vlaneseq
        %v324 = vshrl.u32 %v323, 7
        %v325 = vsub.s32 2, %v324
        %v326 = vrot.slane %v286, %v325
        %v327 = vlaneseq
        %v328 = vshrl.u32 %v327, 7
        %v329 = vsub.s32 2, %v328
        %v330 = vrot.slane %v290, %v329
        %v331 = vlaneseq
        %v332 = vshrl.u32 %v331, 7
        %v333 = vsub.s32 2, %v332
        %v334 = vrot.slane %v294, %v333
        %v335 = vlaneseq
        %v336 = vshrl.u32 %v335, 7
        %v337 = vsub.s32 2, %v336
        %v338 = vrot.slane %v298, %v337
        %v339 = vmul.f32 %v310, %v255
        %v340 = vmul.f32 %v314, %v256
        %v341 = vmul.f32 %v318, %v257
        %v342 = vmul.f32 %v322, %v258
        %v343 = vmul.f32 %v326, %v259
        %v344 = vmul.f32 %v330, %v260
        %v345 = vmul.f32 %v334, %v261
        %v346 = vmul.f32 %v338, %v262
        %v351 = vlaneseq
        %v352 = vshrl.u32 %v351, 7
        %v353 = vsub.s32 0, %v352
        %v354 = vrot.slane %v243, %v353
        %v355 = vlaneseq
        %v356 = vshrl.u32 %v355, 7
        %v357 = vsub.s32 4, %v356
        %v358 = vrot.slane %v243, %v357
        %v359 = vlaneseq
        %v360 = vshrl.u32 %v359, 7
        %v361 = vsub.s32 0, %v360
        %v362 = vrot.slane %v244, %v361
        %v363 = vlaneseq
        %v364 = vshrl.u32 %v363, 7
        %v365 = vsub.s32 4, %v364
        %v366 = vrot.slane %v244, %v365
        %v367 = vlaneseq
        %v368 = vshrl.u32 %v367, 7
        %v369 = vsub.s32 0, %v368
        %v370 = vrot.slane %v245, %v369
        %v371 = vlaneseq
        %v372 = vshrl.u32 %v371, 7
        %v373 = vsub.s32 4, %v372
        %v374 = vrot.slane %v245, %v373
        %v375 = vlaneseq
        %v376 = vshrl.u32 %v375, 7
        %v377 = vsub.s32 0, %v376
        %v378 = vrot.slane %v246, %v377
        %v379 = vlaneseq
        %v380 = vshrl.u32 %v379, 7
        %v381 = vsub.s32 4, %v380
        %v382 = vrot.slane %v246, %v381
        %v391 = vlaneseq
        %v392 = vshrl.u32 %v391, 7
        %v393 = vsub.s32 0, %v392
        %v394 = vrot.slane %v354, %v393
        %v395 = vlaneseq
        %v396 = vshrl.u32 %v395, 7
        %v397 = vsub.s32 0, %v396
        %v398 = vrot.slane %v358, %v397
        %v399 = vlaneseq
        %v400 = vshrl.u32 %v399, 7
        %v401 = vsub.s32 0, %v400
        %v402 = vrot.slane %v362, %v401
        %v403 = vlaneseq
        %v404 = vshrl.u32 %v403, 7
        %v405 = vsub.s32 0, %v404
        %v406 = vrot.slane %v366, %v405
        %v407 = vlaneseq
        %v408 = vshrl.u32 %v407, 7
        %v409 = vsub.s32 0, %v408
        %v410 = vrot.slane %v370, %v409
        %v411 = vlaneseq
        %v412 = vshrl.u32 %v411, 7
        %v413 = vsub.s32 0, %v412
        %v414 = vrot.slane %v374, %v413
        %v415 = vlaneseq
        %v416 = vshrl.u32 %v415, 7
        %v417 = vsub.s32 0, %v416
        %v418 = vrot.slane %v378, %v417
        %v419 = vlaneseq
        %v420 = vshrl.u32 %v419, 7
        %v421 = vsub.s32 0, %v420
        %v422 = vrot.slane %v382, %v421
        %v423 = vadd.f32 %v394, %v339
        %v424 = vadd.f32 %v398, %v340
        %v425 = vadd.f32 %v402, %v341
        %v426 = vadd.f32 %v406, %v342
        %v427 = vadd.f32 %v410, %v343
        %v428 = vadd.f32 %v414, %v344
        %v429 = vadd.f32 %v418, %v345
        %v430 = vadd.f32 %v422, %v346
        %431 = vst [vmem:[%s200] sm:$0xff] %v423
        %432 = vst [vmem:[%s200 + $0x8] sm:$0xff] %v424
        %433 = vst [vmem:[%s200 + $0x10] sm:$0xff] %v425
        %434 = vst [vmem:[%s200 + $0x18] sm:$0xff] %v426
        %435 = vst [vmem:[%s200 + $0x20] sm:$0xff] %v427
        %436 = vst [vmem:[%s200 + $0x28] sm:$0xff] %v428
        %437 = vst [vmem:[%s200 + $0x30] sm:$0xff] %v429
        %438 = vst [vmem:[%s200 + $0x38] sm:$0xff] %v430
        %v439 = vlaneseq
        %v440 = vshrl.u32 %v439, 7
        %v441 = vsub.s32 2, %v440
        %v442 = vrot.slane %v243, %v441
        %v443 = vlaneseq
        %v444 = vshrl.u32 %v443, 7
        %v445 = vsub.s32 6, %v444
        %v446 = vrot.slane %v243, %v445
        %v447 = vlaneseq
        %v448 = vshrl.u32 %v447, 7
        %v449 = vsub.s32 2, %v448
        %v450 = vrot.slane %v244, %v449
        %v451 = vlaneseq
        %v452 = vshrl.u32 %v451, 7
        %v453 = vsub.s32 6, %v452
        %v454 = vrot.slane %v244, %v453
        %v455 = vlaneseq
        %v456 = vshrl.u32 %v455, 7
        %v457 = vsub.s32 2, %v456
        %v458 = vrot.slane %v245, %v457
        %v459 = vlaneseq
        %v460 = vshrl.u32 %v459, 7
        %v461 = vsub.s32 6, %v460
        %v462 = vrot.slane %v245, %v461
        %v463 = vlaneseq
        %v464 = vshrl.u32 %v463, 7
        %v465 = vsub.s32 2, %v464
        %v466 = vrot.slane %v246, %v465
        %v467 = vlaneseq
        %v468 = vshrl.u32 %v467, 7
        %v469 = vsub.s32 6, %v468
        %v470 = vrot.slane %v246, %v469
        %vm479 = vcmask 1040384
        %v480 = vsel %vm479, %v442, 0.0
        %v481 = vsel %vm479, %v446, 0.0
        %v482 = vadd.f32 %v480, %v481
        %v483 = vsel %vm479, %v450, 0.0
        %v484 = vadd.f32 %v482, %v483
        %v485 = vsel %vm479, %v454, 0.0
        %v486 = vadd.f32 %v484, %v485
        %v487 = vsel %vm479, %v458, 0.0
        %v488 = vadd.f32 %v486, %v487
        %v489 = vsel %vm479, %v462, 0.0
        %v490 = vadd.f32 %v488, %v489
        %v491 = vsel %vm479, %v466, 0.0
        %v492 = vadd.f32 %v490, %v491
        %v493 = vsel %vm479, %v470, 0.0
        %v494 = vadd.f32 %v492, %v493
        %495 = vadd.xlane.f32.xlu0 %v494
        %v496 = vpop.xlane.xlu0 %495
        %v497 = vrot.slane %v496, 4
        %v498 = vadd.f32 %v496, %v497
        %v499 = vrot.slane %v498, 2
        %v500 = vadd.f32 %v498, %v499
        %v501 = vrot.slane %v500, 1
        %v502 = vadd.f32 %v500, %v501
        %s503 = vtos %v502
        %v504 = vmul.f32 %v255, %v255
        %v505 = vmul.f32 %v256, %v256
        %v506 = vmul.f32 %v257, %v257
        %v507 = vmul.f32 %v258, %v258
        %v508 = vmul.f32 %v259, %v259
        %v509 = vmul.f32 %v260, %v260
        %v510 = vmul.f32 %v261, %v261
        %v511 = vmul.f32 %v262, %v262
        %v512 = vadd.f32 %v504, %v505
        %v513 = vadd.f32 %v512, %v506
        %v514 = vadd.f32 %v513, %v507
        %v515 = vadd.f32 %v514, %v508
        %v516 = vadd.f32 %v515, %v509
        %v517 = vadd.f32 %v516, %v510
        %v518 = vadd.f32 %v517, %v511
        %519 = vadd.xlane.f32.xlu0 %v518
        %v520 = vpop.xlane.xlu0 %519
        %s521 = ssub.f32 -940.99304, %s503
        %v522 = vmul.f32 %v520, 0.5
        %v523 = vstv %s521
        %v524 = vsub.f32 %v523, %v522
        %vm525 = vcmask 7168
        %526 = vst.msk [vmem:[%s210] sm:$0xff] %vm525, %v524
        %s527 = sand.u32 %s77, 1
        %s528 = scalar_lea.sflag [#allocation4], %s527
        %s529 = sand.u32 %s77, 1
        %s530 = smul.addr %s529, 64
        %s531 = scalar_lea.vmem [#allocation7], %s530
        %p532 = scmp.lt.s32.totalorder %s22, 1
        %s533 = scalar_select %p532, %s22, 1
        %s534 = smul.addr %s533, 8
        %s535 = scalar_lea.vmem %s3, %s534
        // Predicated region
        $region37: #{tpu_custom_call.1} parent=27 // pred_check
          %p536 = pneg %p87
        $region38: #{tpu_custom_call.1} parent=27 // pred_check_branch
          %538 = sbr.rel (%p536) target = $region40
        $region39: #{tpu_custom_call.1} parent=27 // pred_region
          %s540 = ssub.s32 1024, 1024
          %541 = vsyncadd %s528, %s540
          %s542 = smul.addr %s22, 8
          %s543 = smul.addr %s542, 128
          %s544 = scalar_lea.hbm %s2, %s543
          %s546 = sshll.u32 %s531, 4
          %s547 = int_to_ptr.vmem [resolvable:$true] %s546
          %549 = dma.vmem_to_hbm [thread:$0]  %s547, 1024, %s544, %s528
        $region40: #{tpu_custom_call.1} parent=27 // pred_fallthru
          _
        // Predicated region
        $region41: #{tpu_custom_call.1} parent=27 // pred_check
          %p550 = pneg %p113
        $region42: #{tpu_custom_call.1} parent=27 // pred_check_branch
          %552 = sbr.rel (%p550) target = $region44
        $region43: #{tpu_custom_call.1} parent=27 // pred_region
          _
        $region44: #{tpu_custom_call.1} parent=27 // pred_fallthru
          _
      $region28: #{tpu_custom_call.1} parent=5 // pred_fallthru
        _
      %p553 = scmp.le.s32.totalorder 2, %s17
      // Predicated region
      $region45: #{tpu_custom_call.1} parent=5 // pred_check
        %p554 = pneg %p553
      $region46: #{tpu_custom_call.1} parent=5 // pred_check_branch
        %556 = sbr.rel (%p554) target = $region48
      $region47: #{tpu_custom_call.1} parent=5 // pred_region
        %s557 = ssub.s32 %s17, 2
        // Predicated region
        $region49: #{tpu_custom_call.1} parent=47 // pred_check
          %p558 = pneg %p93
        $region50: #{tpu_custom_call.1} parent=47 // pred_check_branch
          %560 = sbr.rel (%p558) target = $region52
        $region51: #{tpu_custom_call.1} parent=47 // pred_region
          %s561 = sand.u32 %s78, 1
          %s562 = scalar_lea.sflag [#allocation4], %s561
          %s563 = sand.u32 %s78, 1
          %s564 = smul.addr %s563, 64
          %s565 = scalar_lea.vmem [#allocation7], %s564
          %566 = dma.done %s562, 1024
        $region52: #{tpu_custom_call.1} parent=47 // pred_fallthru
          _
        // Predicated region
        $region53: #{tpu_custom_call.1} parent=47 // pred_check
          %p567 = pneg %p119
        $region54: #{tpu_custom_call.1} parent=47 // pred_check_branch
          %569 = sbr.rel (%p567) target = $region56
        $region55: #{tpu_custom_call.1} parent=47 // pred_region
          %p570 = scmp.lt.s32.totalorder %s23, 1
          %s571 = scalar_select %p570, %s23, 1
          %s572 = smul.addr %s571, 8
          %s573 = scalar_lea.vmem %s3, %s572
        $region56: #{tpu_custom_call.1} parent=47 // pred_fallthru
          _
      $region48: #{tpu_custom_call.1} parent=5 // pred_fallthru
        _
    $region6: #{tpu_custom_call.1} parent=1 // loop_footer
      %s21 = sadd.s32 1, %s17
    $region7: #{tpu_custom_call.1} parent=1 // loop_footer_branch
      %16 = sbr.rel target = $region3
    $region8: #{tpu_custom_call.1} parent=1 // loop_exit
      _
    %574 = vsyncpa [#allocation3], 1
    %s575 = scalar_lea.sflag [#allocation3], 1
    %576 = vsyncpa %s575, 1
    %577 = vsyncpa [#allocation6], 1
    %s578 = scalar_lea.sflag [#allocation6], 1
    %579 = vsyncpa %s578, 1
    %580 = vsyncpa [#allocation4], 1
    %s581 = scalar_lea.sflag [#allocation4], 1
    %582 = vsyncpa %s581, 1

</llo_original>
